<compile_context>
chip_gen: v6e
topology: v6e:2x2x1
jax: 0.10.0
libtpu: 0.0.40
codegen_flags: <defaults>
</compile_context>

<pallas_src>
import functools
import numpy as np
import jax
import jax.numpy as jnp
from jax import lax
from jax.experimental import pallas as pl
from jax.experimental.pallas import tpu as pltpu

NUM_CLASSES = 26

# Static weight table from the PyTorch module (weight_type == 'static').
_STATIC_WEIGHTS = np.array(
    [0.1435, 0.187, 0.1692, 0.1165, 0.1949, 0.1204, 0.1728, 0.1372, 0.162,
     0.154, 0.1987, 0.1057, 0.1482, 0.1192, 0.159, 0.1929, 0.1158, 0.1907,
     0.1345, 0.1307, 0.1665, 0.1698, 0.1797, 0.1657, 0.152, 0.1537],
    dtype=np.float32,
)

# Target elements per tile (per input buffer). 512K f32 elems ~= 2 MiB/buffer;
# 2 inputs x 2 pipeline buffers + <=2 full-tile f32 accumulators ~= 12-16 MiB VMEM.
_DEFAULT_TILE_ELEMS = 512 * 1024


def _make_kernel(tm, c_eff, m_rows, need_mask, need_tsum):
    """Build the grid-step kernel.

    Per step: pure elementwise VPU accumulation into resident VMEM scratch.
    Finalize (last step): single sublane reduce -> (1, c_eff) outputs.
    """

    def kernel(pred_ref, target_ref, *refs):
        if need_tsum:
            sse_ref, tsum_ref, acc_ref, tacc_ref = refs
        else:
            sse_ref, acc_ref = refs
            tsum_ref = tacc_ref = None

        step = pl.program_id(0)

        @pl.when(step == 0)
        def _init():
            acc_ref[...] = jnp.zeros_like(acc_ref)
            if need_tsum:
                tacc_ref[...] = jnp.zeros_like(tacc_ref)

        p = pred_ref[...].astype(jnp.float32)
        t = target_ref[...].astype(jnp.float32)
        d = p - t
        d2 = d * d

        if need_mask:
            # Only traced when m_rows % tm != 0: mask rows past the real end
            # of the (reshaped) batch so the overhanging last block adds 0.
            # jnp.where is a select, so garbage/NaN in the OOB region is safe.
            rows = step * tm + lax.broadcasted_iota(jnp.int32, (tm, c_eff), 0)
            valid = rows < m_rows
            d2 = jnp.where(valid, d2, 0.0)
            if need_tsum:
                t = jnp.where(valid, t, 0.0)

        acc_ref[...] += d2
        if need_tsum:
            tacc_ref[...] += t

        @pl.when(step == pl.num_programs(0) - 1)
        def _fini():
            sse_ref[...] = jnp.sum(acc_ref[...], axis=0, keepdims=True)
            if need_tsum:
                tsum_ref[...] = jnp.sum(tacc_ref[...], axis=0, keepdims=True)

    return kernel


@functools.partial(jax.jit, static_argnames=("weight_type", "tile_elems"))
def discrete_loss(pred, target, *, weight_type="mean",
                  tile_elems=_DEFAULT_TILE_ELEMS):
    """Pallas implementation of DiscreteLoss.forward. Returns a scalar f32."""
    n, c = pred.shape
    assert c == NUM_CLASSES, f"expected {NUM_CLASSES} classes, got {c}"
    assert target.shape == (n, c)
    if weight_type not in ("mean", "static", "dynamic"):
        raise ValueError(f"unknown weight_type: {weight_type}")

    # ---- lane-dense view: (N, 26) -> (N//g, g*26), a free row-major reshape.
    g = 64
    while g > 1 and n % g != 0:
        g //= 2
    c_eff = g * NUM_CLASSES          # 1664 lanes when g == 64 (13 full vregs)
    m_rows = n // g
    pred2d = pred.reshape(m_rows, c_eff)
    target2d = target.reshape(m_rows, c_eff)

    # ---- row-tile selection (multiple of 8, or the full extent).
    tm = max(8, (tile_elems // c_eff) // 8 * 8)
    if tm >= m_rows:
        tm = m_rows                   # single block == full extent (always legal)
    need_mask = (m_rows % tm) != 0
    grid = (pl.cdiv(m_rows, tm),)

    need_tsum = (weight_type == "dynamic")

    block_in = pl.BlockSpec((tm, c_eff), lambda i: (i, 0))
    block_out = pl.BlockSpec((1, c_eff), lambda i: (0, 0))
    scratch = [pltpu.VMEM((tm, c_eff), jnp.float32)]
    if need_tsum:
        out_shape = (jax.ShapeDtypeStruct((1, c_eff), jnp.float32),
                     jax.ShapeDtypeStruct((1, c_eff), jnp.float32))
        out_specs = [block_out, block_out]
        scratch = scratch * 2
    else:
        out_shape = jax.ShapeDtypeStruct((1, c_eff), jnp.float32)
        out_specs = block_out

    results = pl.pallas_call(
        _make_kernel(tm, c_eff, m_rows, need_mask, need_tsum),
        out_shape=out_shape,
        grid_spec=pltpu.PrefetchScalarGridSpec(
            num_scalar_prefetch=0,
            grid=grid,
            in_specs=[block_in, block_in],
            out_specs=out_specs,
            scratch_shapes=scratch,
        ),
        compiler_params=pltpu.CompilerParams(
            dimension_semantics=("arbitrary",),          # reduction over batch
            vmem_limit_bytes=32 * 1024 * 1024,
        ),
    )(pred2d, target2d)

    # ---- tiny wrapper-side epilogue: fold lanes -> classes, apply weights once.
    if need_tsum:
        sse_lane, tsum_lane = results
    else:
        sse_lane = results

    sse_pc = sse_lane.reshape(g, NUM_CLASSES).sum(axis=0)      # (26,)
    if weight_type == "mean":
        w = jnp.full((NUM_CLASSES,), 1.0 / NUM_CLASSES, jnp.float32)
    elif weight_type == "static":
        w = jnp.asarray(_STATIC_WEIGHTS)
    else:  # dynamic (prepare_dynamic_weights, stats fused into the same sweep)
        tsum_pc = tsum_lane.reshape(g, NUM_CLASSES).sum(axis=0)
        w = jnp.where(tsum_pc != 0.0,
                      1.0 / jnp.log(tsum_pc + 1.2),
                      jnp.float32(1e-4))
    return jnp.sum(sse_pc * w)


def _reference_loss(pred, target, weight_type="mean"):
    pred = np.asarray(pred, np.float32)
    target = np.asarray(target, np.float32)
    if weight_type == "mean":
        w = np.ones((1, NUM_CLASSES), np.float32) / NUM_CLASSES
    elif weight_type == "static":
        w = _STATIC_WEIGHTS[None, :]
    else:  # dynamic
        ts = target.sum(axis=0, keepdims=True)
        w = np.where(ts != 0.0, 1.0 / np.log(ts + 1.2), 1e-4).astype(np.float32)
    return float((((pred - target) ** 2) * w).sum())


if __name__ == "__main__":
    key = jax.random.PRNGKey(0)
    k1, k2, k3, k4 = jax.random.split(key, 4)

    ok = True

    # Small batch (single-block path).
    N = 16
    pred = jax.random.normal(k1, (N, NUM_CLASSES), dtype=jnp.float32)
    target = (jax.random.uniform(k2, (N, NUM_CLASSES)) > 0.7).astype(jnp.float32)
    for wt in ("mean", "static", "dynamic"):
        loss = jax.block_until_ready(discrete_loss(pred, target, weight_type=wt))
        ref = _reference_loss(np.asarray(pred), np.asarray(target), wt)
        if not np.allclose(float(loss), ref, rtol=1e-5, atol=1e-5):
            ok = False
            print(f"MISMATCH ({wt}, N={N}): pallas={float(loss)} ref={ref}")

    # Larger, non-divisible batch with a tiny tile to exercise the tiled +
    # masked-tail path (grid > 1, last block overhangs).
    N2 = 200
    pred2 = jax.random.normal(k3, (N2, NUM_CLASSES), dtype=jnp.float32)
    target2 = (jax.random.uniform(k4, (N2, NUM_CLASSES)) > 0.7).astype(jnp.float32)
    for wt in ("mean", "static", "dynamic"):
        loss = jax.block_until_ready(
            discrete_loss(pred2, target2, weight_type=wt, tile_elems=2048))
        ref = _reference_loss(np.asarray(pred2), np.asarray(target2), wt)
        if not np.allclose(float(loss), ref, rtol=1e-5, atol=1e-5):
            ok = False
            print(f"MISMATCH ({wt}, N={N2}): pallas={float(loss)} ref={ref}")

    # bf16 inputs (cast to f32 inside the kernel).
    pred_bf = pred.astype(jnp.bfloat16)
    loss = jax.block_until_ready(
        discrete_loss(pred_bf, target, weight_type="static"))
    ref = _reference_loss(np.asarray(pred_bf.astype(jnp.float32)),
                          np.asarray(target), "static")
    if not np.allclose(float(loss), ref, rtol=1e-4, atol=1e-4):
        ok = False
        print(f"MISMATCH (bf16 static): pallas={float(loss)} ref={ref}")

    if ok:
        print("KERNEL_OK")
</pallas_src>

<mosaic_0001>
module attributes {stable_mosaic.version = 11 : i64} {
  func.func @kernel(%arg0: i32, %arg1: memref<1x416xf32, #tpu.memory_space<vmem>>, %arg2: memref<1x416xf32, #tpu.memory_space<vmem>>, %arg3: memref<1x416xf32, #tpu.memory_space<vmem>>, %arg4: memref<1x416xf32, #tpu.memory_space<vmem>>) attributes {dimension_semantics = [#tpu.dimension_semantics<arbitrary>], iteration_bounds = array<i64: 1>, scalar_prefetch = 0 : i64, scratch_operands = 1 : i64, tpu.core_type = #tpu.core_type<tc>, window_params = [{transform_indices = @transform_0, window_bounds = array<i64: 1, 416>}, {transform_indices = @transform_1, window_bounds = array<i64: 1, 416>}, {pipeline_mode = #tpu.pipeline_mode<synchronous>, transform_indices = @transform_2, window_bounds = array<i64: 1, 416>}]} {
    %c0_i32 = arith.constant 0 : i32
    %0 = arith.cmpi eq, %arg0, %c0_i32 : i32
    %1 = arith.extui %0 : i1 to i32
    %c0_i32_0 = arith.constant 0 : i32
    %2 = arith.cmpi ne, %1, %c0_i32_0 : i32
    scf.if %2 {
      %cst = arith.constant 0.000000e+00 : f32
      %13 = vector.broadcast %cst : f32 to vector<1x416xf32>
      %c0_10 = arith.constant 0 : index
      %c0_11 = arith.constant 0 : index
      %14 = vector.load %arg4[%c0_10, %c0_11] : memref<1x416xf32, #tpu.memory_space<vmem>>, vector<1x416xf32>
      tpu.vector_store %arg4[%c0_10, %c0_11], %13 {strides = array<i32>} : memref<1x416xf32, #tpu.memory_space<vmem>>, vector<1x416xf32>,
    } else {
    }
    %c0 = arith.constant 0 : index
    %c0_1 = arith.constant 0 : index
    %3 = vector.load %arg1[%c0, %c0_1] : memref<1x416xf32, #tpu.memory_space<vmem>>, vector<1x416xf32>
    %c0_2 = arith.constant 0 : index
    %c0_3 = arith.constant 0 : index
    %4 = vector.load %arg2[%c0_2, %c0_3] : memref<1x416xf32, #tpu.memory_space<vmem>>, vector<1x416xf32>
    %5 = arith.subf %3, %4 : vector<1x416xf32>
    %6 = arith.mulf %5, %5 : vector<1x416xf32>
    %c0_4 = arith.constant 0 : index
    %c0_5 = arith.constant 0 : index
    %7 = vector.load %arg4[%c0_4, %c0_5] : memref<1x416xf32, #tpu.memory_space<vmem>>, vector<1x416xf32>
    %8 = arith.addf %7, %6 : vector<1x416xf32>
    %c0_6 = arith.constant 0 : index
    %c0_7 = arith.constant 0 : index
    %9 = vector.load %arg4[%c0_6, %c0_7] : memref<1x416xf32, #tpu.memory_space<vmem>>, vector<1x416xf32>
    tpu.vector_store %arg4[%c0_6, %c0_7], %8 {strides = array<i32>} : memref<1x416xf32, #tpu.memory_space<vmem>>, vector<1x416xf32>,
    %c0_i32_8 = arith.constant 0 : i32
    %10 = arith.cmpi eq, %arg0, %c0_i32_8 : i32
    %11 = arith.extui %10 : i1 to i32
    %c0_i32_9 = arith.constant 0 : i32
    %12 = arith.cmpi ne, %11, %c0_i32_9 : i32
    scf.if %12 {
      %c0_10 = arith.constant 0 : index
      %c0_11 = arith.constant 0 : index
      %13 = vector.load %arg4[%c0_10, %c0_11] : memref<1x416xf32, #tpu.memory_space<vmem>>, vector<1x416xf32>
      %cst = arith.constant dense<0.000000e+00> : vector<416xf32>
      %14 = vector.multi_reduction <add>, %13, %cst [0] : vector<1x416xf32> to vector<416xf32>
      %15 = vector.shape_cast %14 : vector<416xf32> to vector<1x416xf32>
      %c0_12 = arith.constant 0 : index
      %c0_13 = arith.constant 0 : index
      %16 = vector.load %arg3[%c0_12, %c0_13] : memref<1x416xf32, #tpu.memory_space<vmem>>, vector<1x416xf32>
      tpu.vector_store %arg3[%c0_12, %c0_13], %15 {strides = array<i32>} : memref<1x416xf32, #tpu.memory_space<vmem>>, vector<1x416xf32>,
    } else {
    }
    return
  }
  func.func @transform_0(%arg0: i32) -> (i32, i32) {
    %c0_i32 = arith.constant 0 : i32
    %c0_i32_0 = arith.constant 0 : i32
    return %arg0, %c0_i32 : i32, i32
  }
  func.func @transform_1(%arg0: i32) -> (i32, i32) {
    %c0_i32 = arith.constant 0 : i32
    %c0_i32_0 = arith.constant 0 : i32
    return %arg0, %c0_i32 : i32, i32
  }
  func.func @transform_2(%arg0: i32) -> (i32, i32) {
    %c0_i32 = arith.constant 0 : i32
    %c0_i32_0 = arith.constant 0 : i32
    %c0_i32_1 = arith.constant 0 : i32
    return %c0_i32, %c0_i32_0 : i32, i32
  }
}

</mosaic_0001>

<llo_original>
// kernel: discrete_loss.1
$region0: #{discrete_loss.1}
  #allocation0 [shape = 'u32[]', space=smem, size = 0x4, offset = 0x4, fixed_abs, tag = 'smem constant byte address 0x4 - core index']
  #allocation1 [shape = 'u32[144,128]{1,0:T(1,128)}', space=vmem, size = 0x12000, scoped, tag = 'internal scratch']
  #allocation2 [shape = 'f32[1,416]{1,0:T(1,128)}', space=vmem, size = 0x800, scoped, tag = 'scratch operand']
  %s0 = inlined_call_operand.vmem [shape: f32[1,416], index: 0, kind: input, shape index: {}]
  %s1 = inlined_call_operand.vmem [shape: f32[1,416], index: 1, kind: input, shape index: {}]
  %s2 = inlined_call_operand.vmem [shape: f32[1,416], index: 2, kind: output, shape index: {}]
  %s3 = sld [smem:[#allocation0]]
  $region26: #{discrete_loss.1} parent=0
    _
  %s5 = ssub.s32 1, %s3
  %s6 = scalar_select 0, %s5, %s3
  // Predicated region
  $region2: #{discrete_loss.1} parent=0 // pred_check
    _
  $region3: #{discrete_loss.1} parent=0 // pred_check_branch
    %8 = sbr.rel (0) target = $region5
  $region4: #{discrete_loss.1} parent=0 // pred_region
    _
  $region5: #{discrete_loss.1} parent=0 // pred_fallthru
    _
  // Predicated region
  $region6: #{discrete_loss.1} parent=0 // pred_check
    _
  $region7: #{discrete_loss.1} parent=0 // pred_check_branch
    %10 = sbr.rel (0) target = $region9
  $region8: #{discrete_loss.1} parent=0 // pred_region
    _
  $region9: #{discrete_loss.1} parent=0 // pred_fallthru
    _
  %p11 = scmp.eq.s32.totalorder 0, 0
  // Predicated region
  $region10: #{discrete_loss.1} parent=0 // pred_check
    %p12 = pneg %p11
  $region11: #{discrete_loss.1} parent=0 // pred_check_branch
    %14 = sbr.rel (%p12) target = $region13
  $region12: #{discrete_loss.1} parent=0 // pred_region
    %v15 = vlaneseq
    %vm16 = vcmp.ge.s32.totalorder %v15, 0
    %vm17 = vcmp.lt.s32.totalorder %v15, 416
    %vm18 = vmand %vm16, %vm17
    %19 = vst.msk [vmem:[#allocation2] sm:$0xf] %vm18, 0.0
  $region13: #{discrete_loss.1} parent=0 // pred_fallthru
    _
  %v20 = vld [vmem:[%s0] sm:$0xf]
  %v21 = vld [vmem:[%s1] sm:$0xf]
  %v22 = vsub.f32 %v20, %v21
  %v23 = vmul.f32 %v22, %v22
  %v24 = vld [vmem:[#allocation2] sm:$0xf]
  %v25 = vadd.f32 %v24, %v23
  %v26 = vlaneseq
  %vm27 = vcmp.ge.s32.totalorder %v26, 0
  %vm28 = vcmp.lt.s32.totalorder %v26, 416
  %vm29 = vmand %vm27, %vm28
  %30 = vst.msk [vmem:[#allocation2] sm:$0xf] %vm29, %v25
  // Predicated region
  $region14: #{discrete_loss.1} parent=0 // pred_check
    %p31 = pneg %p11
  $region15: #{discrete_loss.1} parent=0 // pred_check_branch
    %33 = sbr.rel (%p31) target = $region17
  $region16: #{discrete_loss.1} parent=0 // pred_region
    %v34 = vld [vmem:[#allocation2] sm:$0xf]
    %v35 = vadd.f32 %v34, 0.0
    %36 = vst.msk [vmem:[%s2] sm:$0xf] %vm29, %v35
  $region17: #{discrete_loss.1} parent=0 // pred_fallthru
    _
  // Predicated region
  $region18: #{discrete_loss.1} parent=0 // pred_check
    _
  $region19: #{discrete_loss.1} parent=0 // pred_check_branch
    %38 = sbr.rel (0) target = $region21
  $region20: #{discrete_loss.1} parent=0 // pred_region
    _
  $region21: #{discrete_loss.1} parent=0 // pred_fallthru
    _
  // Predicated region
  $region22: #{discrete_loss.1} parent=0 // pred_check
    _
  $region23: #{discrete_loss.1} parent=0 // pred_check_branch
    %40 = sbr.rel (0) target = $region25
  $region24: #{discrete_loss.1} parent=0 // pred_region
    _
  $region25: #{discrete_loss.1} parent=0 // pred_fallthru
    _

</llo_original>
